<compile_context>
chip_gen: v6e
topology: v6e:2x2x1
jax: 0.10.0
libtpu: 0.0.40
codegen_flags: <defaults>
</compile_context>

<pallas_src>
import math
import functools

import jax
import jax.numpy as jnp
from jax import lax
from jax.experimental import pallas as pl
from jax.experimental.pallas import tpu as pltpu


def _ceil8(n: int) -> int:
    return ((n + 7) // 8) * 8


# ----------------------------- layout helpers --------------------------------
def _to_vreg_param(p_hn, batch):
    """(H, NST) -> (8, batch*H*NST//8) vreg layout, tiled across batch."""
    H, NST = p_hn.shape
    v = p_hn.T.reshape(8, (NST // 8) * H)          # row = n//2, col = 32*(n%2)+h
    return jnp.tile(v, (1, batch))


def _to_vreg_state(s_bhn):
    """(B, H, NST) -> (8, B*H*NST//8) vreg layout."""
    B, H, NST = s_bhn.shape
    q = NST // 8
    return s_bhn.reshape(B, H, 8, q).transpose(2, 0, 3, 1).reshape(8, B * q * H)


def _from_vreg_state(v, B, H, NST):
    q = NST // 8
    return v.reshape(8, B, q, H).transpose(1, 3, 0, 2).reshape(B, H, NST)


# ----------------------------- Pallas kernel --------------------------------
def ntm_s4d_kernel(xlhs_ref,   # (8*L, B*D_EXT) f32  x features, replicated over 8 rows per step
                   rfeat_ref,  # (1, B*(R*M+1)) f32  [reads | 1] per batch, flattened
                   s0_ref,     # (16, VC)       f32  rows 0:8 Re(state), 8:16 Im(state) (vreg layout)
                   wp1_ref,    # (120, VC)      f32  [Wenc_x blkdiag | Wenc_r+benc blkdiag | 7 param slabs]
                   wp2_ref,    # (VC+K2, B*NOP) f32  [decoder ctrl path | decoder reads path + bias]
                   o_ref,      # (1, B*NOP)     out  lane-dense padded output
                   s_ref):     # (16, VC)       out  new state (HBM-aliased with s0_ref)
    LV, K1 = xlhs_ref.shape
    K2 = rfeat_ref.shape[1]
    VC = s0_ref.shape[1]
    L = LV // 8

    off_wr = _ceil8(K1)
    off_par = _ceil8(off_wr + K2)

    # ---- hoisted encoder: one MXU matmul yields the whole-sequence drive already
    #      in the per-step (8, VC) vreg layout (rows = n//2, cols = (b, n%2, h)).
    u_x = jnp.dot(xlhs_ref[...], wp1_ref[0:K1, :],
                  preferred_element_type=jnp.float32)                    # (8L, VC)
    # reads + encoder bias: constant over time -> one tiny matmul, row-broadcast add
    u_c = jnp.dot(rfeat_ref[...], wp1_ref[off_wr:off_wr + K2, :],
                  preferred_element_type=jnp.float32)                    # (1, VC)
    u_all = u_x + u_c                                                    # (8L, VC)

    # ---- parameter slabs: each a full (8, VC) tile at an 8-row-aligned offset.
    def par(i):
        lo = off_par + 8 * i
        return wp1_ref[lo:lo + 8, :]
    are, aim, bre, bim = par(0), par(1), par(2), par(3)
    cre, cim, dp1 = par(4), par(5), par(6)   # 2/L and (D+1)/(L*NST) folded at prep

    # per-step drive tiles: 8-row aligned slices -> unmasked full-vreg loads
    u_t = [u_all[8 * t:8 * (t + 1), :] for t in range(L)]

    # usum and Bbar*u are independent of the serial chain -> hoisted
    usum = u_t[0]
    for t in range(1, L):
        usum = usum + u_t[t]
    bu_re = [u_t[t] * bre for t in range(L)]
    bu_im = [u_t[t] * bim for t in range(L)]

    # ---- fully unrolled diagonal complex recurrence: single-vreg VPU ops only
    s_re = s0_ref[0:8, :]
    s_im = s0_ref[8:16, :]
    ssum_re = jnp.zeros_like(s_re)
    ssum_im = jnp.zeros_like(s_im)
    for t in range(L):
        n_re = are * s_re - aim * s_im + bu_re[t]
        n_im = are * s_im + aim * s_re + bu_im[t]
        ssum_re = ssum_re + n_re
        ssum_im = ssum_im + n_im
        s_re, s_im = n_re, n_im

    # ---- linearity: C projection + D skip + residual + mean + decoder folded into
    #      one elementwise combine, a tiny row-sum matmul and the decoder matmuls.
    comp = cre * ssum_re - cim * ssum_im + dp1 * usum                    # (8, VC)
    ones_row = jnp.full((1, 8), 1.0, jnp.float32)
    mean_row = jnp.dot(ones_row, comp, preferred_element_type=jnp.float32)  # (1, VC)
    o = (jnp.dot(mean_row, wp2_ref[0:VC, :], preferred_element_type=jnp.float32)
         + jnp.dot(rfeat_ref[...], wp2_ref[VC:VC + K2, :],
                   preferred_element_type=jnp.float32))                  # (1, B*NOP)

    o_ref[...] = o
    s_ref[0:8, :] = s_re
    s_ref[8:16, :] = s_im


# ----------------------- kernel-parameter preparation -------------------------
def make_kernel_params(params, *, batch, nst, seq_len, d_ext, num_out_pad=128):
    """One-time packing of module parameters into the two kernel weight slabs."""
    assert nst % 8 == 0, "NST must be a multiple of 8 for the vreg layout"
    Wenc, benc = params["Wenc"], params["benc"]
    NI, H = Wenc.shape
    rm = NI - d_ext
    B, L, NST = batch, seq_len, nst
    q = NST // 8
    VC = B * H * q
    NO = params["bdec"].shape[-1]
    NOP = num_out_pad

    Wenc_x, Wenc_r = Wenc[:d_ext], Wenc[d_ext:]
    eye_b = jnp.eye(B, dtype=jnp.float32)

    # -- wp1: encoder(x) block-diag, encoder(reads)+bias block-diag, 7 param slabs
    wenc_v = jnp.kron(eye_b, jnp.tile(Wenc_x, (1, q)))                  # (B*d_ext, VC)
    wr_blk = jnp.concatenate([jnp.tile(Wenc_r, (1, q)),
                              jnp.tile(benc, (1, q))], axis=0)           # (rm+1, q*H)
    wr_v = jnp.kron(eye_b, wr_blk)                                       # (B*(rm+1), VC)

    k1, k2 = B * d_ext, B * (rm + 1)
    off_wr = _ceil8(k1)
    off_par = _ceil8(off_wr + k2)

    dp1_hn = jnp.broadcast_to((params["Dp"].reshape(H, 1) + 1.0) / (L * NST), (H, NST))
    par_slabs = [
        _to_vreg_param(params["Are"], B), _to_vreg_param(params["Aim"], B),
        _to_vreg_param(params["Bre"], B), _to_vreg_param(params["Bim"], B),
        (2.0 / L) * _to_vreg_param(params["Cre"], B),
        (2.0 / L) * _to_vreg_param(params["Cim"], B),
        _to_vreg_param(dp1_hn, B),
    ]
    wp1 = jnp.zeros((off_par + 8 * len(par_slabs), VC), jnp.float32)
    wp1 = wp1.at[0:k1].set(wenc_v.astype(jnp.float32))
    wp1 = wp1.at[off_wr:off_wr + k2].set(wr_v.astype(jnp.float32))
    for i, slab in enumerate(par_slabs):
        wp1 = wp1.at[off_par + 8 * i:off_par + 8 * (i + 1)].set(slab.astype(jnp.float32))

    # -- wp2: decoder controller path (un-expanded, lane-padded), reads path + bias
    wdx_pad = jnp.zeros((H, NOP), jnp.float32).at[:, :NO].set(params["Wdec_x"])
    wdr_pad = jnp.zeros((rm, NOP), jnp.float32).at[:, :NO].set(params["Wdec_r"])
    bd_pad = jnp.zeros((1, NOP), jnp.float32).at[:, :NO].set(params["bdec"])
    wdec_v = jnp.kron(eye_b, jnp.tile(wdx_pad, (q, 1)))                  # (VC, B*NOP)
    wdecr_v = jnp.kron(eye_b, jnp.concatenate([wdr_pad, bd_pad], axis=0))  # (B*(rm+1), B*NOP)
    wp2 = jnp.concatenate([wdec_v, wdecr_v], axis=0).astype(jnp.float32)   # (VC+k2, B*NOP)

    return dict(wp1=wp1, wp2=wp2)


# ------------------------------ JAX wrapper ----------------------------------
@functools.partial(jax.jit, static_argnames=("num_out",))
def ntm_s4d_forward(x, prev_reads, s0_re, s0_im, kp, num_out):
    """x: (B, L, D_EXT); prev_reads: list of (B, M); state: (B, H, NST) re/im."""
    B, L, d_ext = x.shape
    _, H, NST = s0_re.shape
    q = NST // 8
    VC = B * H * q

    # per-call data prep (tiny; fused by XLA)
    xt = jnp.transpose(x, (1, 0, 2)).reshape(L, B * d_ext).astype(jnp.float32)
    xlhs = jnp.broadcast_to(xt[:, None, :], (L, 8, B * d_ext)).reshape(8 * L, B * d_ext)

    reads_cat = jnp.concatenate(prev_reads, axis=1).astype(jnp.float32)   # (B, R*M)
    rfeat = jnp.concatenate([reads_cat, jnp.ones((B, 1), jnp.float32)],
                            axis=1).reshape(1, -1)                        # (1, B*(R*M+1))

    s0_v = jnp.concatenate([_to_vreg_state(s0_re.astype(jnp.float32)),
                            _to_vreg_state(s0_im.astype(jnp.float32))],
                           axis=0)                                        # (16, VC)

    nop = kp["wp2"].shape[1] // B
    vmem = pl.BlockSpec(memory_space=pltpu.MemorySpace.VMEM)
    o_flat, s_new = pl.pallas_call(
        ntm_s4d_kernel,
        out_shape=(jax.ShapeDtypeStruct((1, B * nop), jnp.float32),
                   jax.ShapeDtypeStruct((16, VC), jnp.float32)),
        in_specs=[vmem, vmem, vmem, vmem, vmem],
        out_specs=(vmem, vmem),
        input_output_aliases={2: 1},     # state written back in place
    )(xlhs, rfeat, s0_v, kp["wp1"], kp["wp2"])

    o = o_flat.reshape(B, nop)[:, :num_out]
    s_re = _from_vreg_state(s_new[0:8], B, H, NST)
    s_im = _from_vreg_state(s_new[8:16], B, H, NST)

    # NOTE: the torch forward computes magnitude/phase of the controller state but
    # never uses the result; that dead code is intentionally dropped.
    # use_memory = 0.0 -> the `random.random() < use_memory` branch is never taken:
    # reads / heads_states pass through unchanged.
    # TODO(synk): NTMReadHead/NTMWriteHead/NTMMemory are external modules not defined
    # in this file; the memory-interaction branch is therefore not modelled.
    reads_out = prev_reads
    heads_states_out = None
    return o, (reads_out, (s_re, s_im), heads_states_out)


# --------------------------- pure-JAX reference -------------------------------
def ntm_s4d_reference(x, prev_reads, s0_re, s0_im, params):
    B, L, _ = x.shape
    reads_rep = [jnp.broadcast_to(r[:, None, :], (B, L, r.shape[-1])) for r in prev_reads]
    x_cat = jnp.concatenate([x] + reads_rep, axis=-1)
    x_lbd = jnp.transpose(x_cat, (1, 0, 2)).astype(jnp.float32)
    reads_cat = jnp.concatenate(prev_reads, axis=1)

    u = jnp.einsum("lbd,dh->lbh", x_lbd, params["Wenc"]) + params["benc"][None]

    Are, Aim = params["Are"][None], params["Aim"][None]
    Bre, Bim = params["Bre"][None], params["Bim"][None]
    Cre, Cim = params["Cre"][None], params["Cim"][None]
    Dp = params["Dp"]

    def step(carry, u_t):
        s_re, s_im = carry
        u3 = u_t[:, :, None]
        new_re = Are * s_re - Aim * s_im + Bre * u3
        new_im = Are * s_im + Aim * s_re + Bim * u3
        y = 2.0 * jnp.sum(Cre * new_re - Cim * new_im, axis=-1) + Dp * u_t
        return (new_re, new_im), y + u_t

    (s_re, s_im), ys = lax.scan(step, (s0_re, s0_im), u)
    x_mean = jnp.mean(ys, axis=0)
    o = x_mean @ params["Wdec_x"] + reads_cat @ params["Wdec_r"] + params["bdec"]
    return o, s_re, s_im


# ------------------------------------ main ------------------------------------
if __name__ == "__main__":
    # Small, forward-consistent shapes
    B, L = 2, 8                 # batch, sequence length
    D_EXT = 12                  # external feature size per timestep
    M, R = 16, 1                # memory word size, number of read heads
    NUM_INPUTS = D_EXT + R * M  # encoder input size (x concatenated with reads)
    H = 32                      # controller_size
    NST = 16                    # S4D state size per channel
    NUM_OUT = 10                # num_outputs

    key = jax.random.PRNGKey(0)
    ks = jax.random.split(key, 12)

    # encoder Linear(NUM_INPUTS, H) -- PyTorch default uniform init
    lim_e = 1.0 / math.sqrt(NUM_INPUTS)
    Wenc = jax.random.uniform(ks[0], (NUM_INPUTS, H), jnp.float32, -lim_e, lim_e)
    benc = jax.random.uniform(ks[1], (1, H), jnp.float32, -lim_e, lim_e)

    # decoder Linear(H + R*M, NUM_OUT) -- xavier_uniform weight, normal(0.01) bias
    fan_in, fan_out = H + R * M, NUM_OUT
    lim_d = math.sqrt(6.0 / (fan_in + fan_out))
    Wdec = jax.random.uniform(ks[2], (fan_in, NUM_OUT), jnp.float32, -lim_d, lim_d)
    bdec = 0.01 * jax.random.normal(ks[3], (1, NUM_OUT), jnp.float32)

    # S4D-Lin controller parameters (ZOH discretization), split into re/im float32
    log_dt = jax.random.uniform(ks[4], (H,), jnp.float32,
                                math.log(1e-3), math.log(1e-1))
    dt = jnp.exp(log_dt)
    A = (-0.5 + 1j * jnp.pi * jnp.arange(NST)).astype(jnp.complex64)   # (NST,)
    A = jnp.broadcast_to(A, (H, NST))
    Abar = jnp.exp(dt[:, None].astype(jnp.complex64) * A)
    Bbar = (Abar - 1.0) / A
    C = (jax.random.normal(ks[5], (H, NST)) + 1j * jax.random.normal(ks[6], (H, NST)))
    C = (C * math.sqrt(0.5)).astype(jnp.complex64)
    Dp = jax.random.normal(ks[7], (1, H), jnp.float32)

    params = dict(
        Wenc=Wenc, benc=benc,
        Are=jnp.real(Abar).astype(jnp.float32), Aim=jnp.imag(Abar).astype(jnp.float32),
        Bre=jnp.real(Bbar).astype(jnp.float32), Bim=jnp.imag(Bbar).astype(jnp.float32),
        Cre=jnp.real(C).astype(jnp.float32), Cim=jnp.imag(C).astype(jnp.float32),
        Dp=Dp, Wdec_x=Wdec[:H], Wdec_r=Wdec[H:], bdec=bdec,
    )

    # one-time packing/expansion of parameters for the fused kernel
    kparams = make_kernel_params(params, batch=B, nst=NST, seq_len=L, d_ext=D_EXT)

    # previous state: read-bias vectors (randn * 0.01 repeated over batch) and a
    # zero complex controller state (controller.default_state(batch))
    init_r = 0.01 * jax.random.normal(ks[8], (1, M), jnp.float32)
    prev_reads = [jnp.tile(init_r, (B, 1))]          # R = 1
    s0_re = jnp.zeros((B, H, NST), jnp.float32)
    s0_im = jnp.zeros((B, H, NST), jnp.float32)

    # external input
    x = jax.random.normal(ks[9], (B, L, D_EXT), jnp.float32)

    o, state = ntm_s4d_forward(x, prev_reads, s0_re, s0_im, kparams, num_out=NUM_OUT)
    o = jax.block_until_ready(o)
    s_re, s_im = state[1]

    # correctness check against pure-JAX reference
    o_ref, sre_ref, sim_ref = ntm_s4d_reference(x, prev_reads, s0_re, s0_im, params)
    assert jnp.allclose(o, o_ref, rtol=1e-3, atol=1e-3), "output mismatch"
    assert jnp.allclose(s_re, sre_ref, rtol=1e-3, atol=1e-3), "state(re) mismatch"
    assert jnp.allclose(s_im, sim_ref, rtol=1e-3, atol=1e-3), "state(im) mismatch"

    print("KERNEL_OK")
</pallas_src>

<mosaic_0001>
module attributes {stable_mosaic.version = 11 : i64} {
  func.func @ntm_s4d_kernel(%arg0: memref<64x24xf32, #tpu.memory_space<vmem>>, %arg1: memref<1x34xf32, #tpu.memory_space<vmem>>, %arg2: memref<16x128xf32, #tpu.memory_space<vmem>>, %arg3: memref<120x128xf32, #tpu.memory_space<vmem>>, %arg4: memref<162x256xf32, #tpu.memory_space<vmem>>, %arg5: memref<1x256xf32, #tpu.memory_space<vmem>>, %arg6: memref<16x128xf32, #tpu.memory_space<vmem>>) attributes {dimension_semantics = [], scalar_prefetch = 0 : i64, scratch_operands = 0 : i64, tpu.core_type = #tpu.core_type<tc>} {
    %c0 = arith.constant 0 : index
    %c0_0 = arith.constant 0 : index
    %0 = vector.load %arg0[%c0, %c0_0] : memref<64x24xf32, #tpu.memory_space<vmem>>, vector<64x24xf32>
    %c0_1 = arith.constant 0 : index
    %c0_2 = arith.constant 0 : index
    %1 = vector.load %arg3[%c0_1, %c0_2] : memref<120x128xf32, #tpu.memory_space<vmem>>, vector<24x128xf32>
    %cst = arith.constant dense<0.000000e+00> : vector<64x128xf32>
    %2 = tpu.matmul %0, %1, %cst {dimension_numbers = #tpu.dot_dimension_numbers<[1], [0], [0], [1], [0, 0, 1, 1], [], []>} : vector<64x24xf32>, vector<24x128xf32>, vector<64x128xf32> -> vector<64x128xf32>
    %c0_3 = arith.constant 0 : index
    %c0_4 = arith.constant 0 : index
    %3 = vector.load %arg1[%c0_3, %c0_4] : memref<1x34xf32, #tpu.memory_space<vmem>>, vector<1x34xf32>
    %c24 = arith.constant 24 : index
    %c0_5 = arith.constant 0 : index
    %4 = vector.load %arg3[%c24, %c0_5] : memref<120x128xf32, #tpu.memory_space<vmem>>, vector<34x128xf32>
    %cst_6 = arith.constant dense<0.000000e+00> : vector<1x128xf32>
    %5 = tpu.matmul %3, %4, %cst_6 {dimension_numbers = #tpu.dot_dimension_numbers<[1], [0], [0], [1], [0, 0, 1, 1], [], []>} : vector<1x34xf32>, vector<34x128xf32>, vector<1x128xf32> -> vector<1x128xf32>
    %6 = vector.broadcast %5 : vector<1x128xf32> to vector<64x128xf32>
    %7 = arith.addf %2, %6 : vector<64x128xf32>
    %c64 = arith.constant 64 : index
    %c0_7 = arith.constant 0 : index
    %8 = vector.load %arg3[%c64, %c0_7] : memref<120x128xf32, #tpu.memory_space<vmem>>, vector<8x128xf32>
    %c72 = arith.constant 72 : index
    %c0_8 = arith.constant 0 : index
    %9 = vector.load %arg3[%c72, %c0_8] : memref<120x128xf32, #tpu.memory_space<vmem>>, vector<8x128xf32>
    %c80 = arith.constant 80 : index
    %c0_9 = arith.constant 0 : index
    %10 = vector.load %arg3[%c80, %c0_9] : memref<120x128xf32, #tpu.memory_space<vmem>>, vector<8x128xf32>
    %c88 = arith.constant 88 : index
    %c0_10 = arith.constant 0 : index
    %11 = vector.load %arg3[%c88, %c0_10] : memref<120x128xf32, #tpu.memory_space<vmem>>, vector<8x128xf32>
    %c96 = arith.constant 96 : index
    %c0_11 = arith.constant 0 : index
    %12 = vector.load %arg3[%c96, %c0_11] : memref<120x128xf32, #tpu.memory_space<vmem>>, vector<8x128xf32>
    %c104 = arith.constant 104 : index
    %c0_12 = arith.constant 0 : index
    %13 = vector.load %arg3[%c104, %c0_12] : memref<120x128xf32, #tpu.memory_space<vmem>>, vector<8x128xf32>
    %c112 = arith.constant 112 : index
    %c0_13 = arith.constant 0 : index
    %14 = vector.load %arg3[%c112, %c0_13] : memref<120x128xf32, #tpu.memory_space<vmem>>, vector<8x128xf32>
    %15 = vector.extract_strided_slice %7 {offsets = [0, 0], sizes = [8, 128], strides = [1, 1]} : vector<64x128xf32> to vector<8x128xf32>
    %16 = vector.extract_strided_slice %7 {offsets = [8, 0], sizes = [8, 128], strides = [1, 1]} : vector<64x128xf32> to vector<8x128xf32>
    %17 = vector.extract_strided_slice %7 {offsets = [16, 0], sizes = [8, 128], strides = [1, 1]} : vector<64x128xf32> to vector<8x128xf32>
    %18 = vector.extract_strided_slice %7 {offsets = [24, 0], sizes = [8, 128], strides = [1, 1]} : vector<64x128xf32> to vector<8x128xf32>
    %19 = vector.extract_strided_slice %7 {offsets = [32, 0], sizes = [8, 128], strides = [1, 1]} : vector<64x128xf32> to vector<8x128xf32>
    %20 = vector.extract_strided_slice %7 {offsets = [40, 0], sizes = [8, 128], strides = [1, 1]} : vector<64x128xf32> to vector<8x128xf32>
    %21 = vector.extract_strided_slice %7 {offsets = [48, 0], sizes = [8, 128], strides = [1, 1]} : vector<64x128xf32> to vector<8x128xf32>
    %22 = vector.extract_strided_slice %7 {offsets = [56, 0], sizes = [8, 128], strides = [1, 1]} : vector<64x128xf32> to vector<8x128xf32>
    %23 = arith.addf %15, %16 : vector<8x128xf32>
    %24 = arith.addf %23, %17 : vector<8x128xf32>
    %25 = arith.addf %24, %18 : vector<8x128xf32>
    %26 = arith.addf %25, %19 : vector<8x128xf32>
    %27 = arith.addf %26, %20 : vector<8x128xf32>
    %28 = arith.addf %27, %21 : vector<8x128xf32>
    %29 = arith.addf %28, %22 : vector<8x128xf32>
    %30 = arith.mulf %15, %10 : vector<8x128xf32>
    %31 = arith.mulf %16, %10 : vector<8x128xf32>
    %32 = arith.mulf %17, %10 : vector<8x128xf32>
    %33 = arith.mulf %18, %10 : vector<8x128xf32>
    %34 = arith.mulf %19, %10 : vector<8x128xf32>
    %35 = arith.mulf %20, %10 : vector<8x128xf32>
    %36 = arith.mulf %21, %10 : vector<8x128xf32>
    %37 = arith.mulf %22, %10 : vector<8x128xf32>
    %38 = arith.mulf %15, %11 : vector<8x128xf32>
    %39 = arith.mulf %16, %11 : vector<8x128xf32>
    %40 = arith.mulf %17, %11 : vector<8x128xf32>
    %41 = arith.mulf %18, %11 : vector<8x128xf32>
    %42 = arith.mulf %19, %11 : vector<8x128xf32>
    %43 = arith.mulf %20, %11 : vector<8x128xf32>
    %44 = arith.mulf %21, %11 : vector<8x128xf32>
    %45 = arith.mulf %22, %11 : vector<8x128xf32>
    %c0_14 = arith.constant 0 : index
    %c0_15 = arith.constant 0 : index
    %46 = vector.load %arg2[%c0_14, %c0_15] : memref<16x128xf32, #tpu.memory_space<vmem>>, vector<8x128xf32>
    %c8 = arith.constant 8 : index
    %c0_16 = arith.constant 0 : index
    %47 = vector.load %arg2[%c8, %c0_16] : memref<16x128xf32, #tpu.memory_space<vmem>>, vector<8x128xf32>
    %cst_17 = arith.constant 0.000000e+00 : f32
    %48 = vector.broadcast %cst_17 : f32 to vector<8x128xf32>
    %cst_18 = arith.constant 0.000000e+00 : f32
    %49 = vector.broadcast %cst_18 : f32 to vector<8x128xf32>
    %50 = arith.mulf %8, %46 : vector<8x128xf32>
    %51 = arith.mulf %9, %47 : vector<8x128xf32>
    %52 = arith.subf %50, %51 : vector<8x128xf32>
    %53 = arith.addf %52, %30 : vector<8x128xf32>
    %54 = arith.mulf %8, %47 : vector<8x128xf32>
    %55 = arith.mulf %9, %46 : vector<8x128xf32>
    %56 = arith.addf %54, %55 : vector<8x128xf32>
    %57 = arith.addf %56, %38 : vector<8x128xf32>
    %58 = arith.addf %48, %53 : vector<8x128xf32>
    %59 = arith.addf %49, %57 : vector<8x128xf32>
    %60 = arith.mulf %8, %53 : vector<8x128xf32>
    %61 = arith.mulf %9, %57 : vector<8x128xf32>
    %62 = arith.subf %60, %61 : vector<8x128xf32>
    %63 = arith.addf %62, %31 : vector<8x128xf32>
    %64 = arith.mulf %8, %57 : vector<8x128xf32>
    %65 = arith.mulf %9, %53 : vector<8x128xf32>
    %66 = arith.addf %64, %65 : vector<8x128xf32>
    %67 = arith.addf %66, %39 : vector<8x128xf32>
    %68 = arith.addf %58, %63 : vector<8x128xf32>
    %69 = arith.addf %59, %67 : vector<8x128xf32>
    %70 = arith.mulf %8, %63 : vector<8x128xf32>
    %71 = arith.mulf %9, %67 : vector<8x128xf32>
    %72 = arith.subf %70, %71 : vector<8x128xf32>
    %73 = arith.addf %72, %32 : vector<8x128xf32>
    %74 = arith.mulf %8, %67 : vector<8x128xf32>
    %75 = arith.mulf %9, %63 : vector<8x128xf32>
    %76 = arith.addf %74, %75 : vector<8x128xf32>
    %77 = arith.addf %76, %40 : vector<8x128xf32>
    %78 = arith.addf %68, %73 : vector<8x128xf32>
    %79 = arith.addf %69, %77 : vector<8x128xf32>
    %80 = arith.mulf %8, %73 : vector<8x128xf32>
    %81 = arith.mulf %9, %77 : vector<8x128xf32>
    %82 = arith.subf %80, %81 : vector<8x128xf32>
    %83 = arith.addf %82, %33 : vector<8x128xf32>
    %84 = arith.mulf %8, %77 : vector<8x128xf32>
    %85 = arith.mulf %9, %73 : vector<8x128xf32>
    %86 = arith.addf %84, %85 : vector<8x128xf32>
    %87 = arith.addf %86, %41 : vector<8x128xf32>
    %88 = arith.addf %78, %83 : vector<8x128xf32>
    %89 = arith.addf %79, %87 : vector<8x128xf32>
    %90 = arith.mulf %8, %83 : vector<8x128xf32>
    %91 = arith.mulf %9, %87 : vector<8x128xf32>
    %92 = arith.subf %90, %91 : vector<8x128xf32>
    %93 = arith.addf %92, %34 : vector<8x128xf32>
    %94 = arith.mulf %8, %87 : vector<8x128xf32>
    %95 = arith.mulf %9, %83 : vector<8x128xf32>
    %96 = arith.addf %94, %95 : vector<8x128xf32>
    %97 = arith.addf %96, %42 : vector<8x128xf32>
    %98 = arith.addf %88, %93 : vector<8x128xf32>
    %99 = arith.addf %89, %97 : vector<8x128xf32>
    %100 = arith.mulf %8, %93 : vector<8x128xf32>
    %101 = arith.mulf %9, %97 : vector<8x128xf32>
    %102 = arith.subf %100, %101 : vector<8x128xf32>
    %103 = arith.addf %102, %35 : vector<8x128xf32>
    %104 = arith.mulf %8, %97 : vector<8x128xf32>
    %105 = arith.mulf %9, %93 : vector<8x128xf32>
    %106 = arith.addf %104, %105 : vector<8x128xf32>
    %107 = arith.addf %106, %43 : vector<8x128xf32>
    %108 = arith.addf %98, %103 : vector<8x128xf32>
    %109 = arith.addf %99, %107 : vector<8x128xf32>
    %110 = arith.mulf %8, %103 : vector<8x128xf32>
    %111 = arith.mulf %9, %107 : vector<8x128xf32>
    %112 = arith.subf %110, %111 : vector<8x128xf32>
    %113 = arith.addf %112, %36 : vector<8x128xf32>
    %114 = arith.mulf %8, %107 : vector<8x128xf32>
    %115 = arith.mulf %9, %103 : vector<8x128xf32>
    %116 = arith.addf %114, %115 : vector<8x128xf32>
    %117 = arith.addf %116, %44 : vector<8x128xf32>
    %118 = arith.addf %108, %113 : vector<8x128xf32>
    %119 = arith.addf %109, %117 : vector<8x128xf32>
    %120 = arith.mulf %8, %113 : vector<8x128xf32>
    %121 = arith.mulf %9, %117 : vector<8x128xf32>
    %122 = arith.subf %120, %121 : vector<8x128xf32>
    %123 = arith.addf %122, %37 : vector<8x128xf32>
    %124 = arith.mulf %8, %117 : vector<8x128xf32>
    %125 = arith.mulf %9, %113 : vector<8x128xf32>
    %126 = arith.addf %124, %125 : vector<8x128xf32>
    %127 = arith.addf %126, %45 : vector<8x128xf32>
    %128 = arith.addf %118, %123 : vector<8x128xf32>
    %129 = arith.addf %119, %127 : vector<8x128xf32>
    %130 = arith.mulf %12, %128 : vector<8x128xf32>
    %131 = arith.mulf %13, %129 : vector<8x128xf32>
    %132 = arith.subf %130, %131 : vector<8x128xf32>
    %133 = arith.mulf %14, %29 : vector<8x128xf32>
    %134 = arith.addf %132, %133 : vector<8x128xf32>
    %cst_19 = arith.constant 1.000000e+00 : f32
    %135 = vector.broadcast %cst_19 : f32 to vector<1x8xf32>
    %cst_20 = arith.constant dense<0.000000e+00> : vector<1x128xf32>
    %136 = tpu.matmul %135, %134, %cst_20 {dimension_numbers = #tpu.dot_dimension_numbers<[1], [0], [0], [1], [0, 0, 1, 1], [], []>} : vector<1x8xf32>, vector<8x128xf32>, vector<1x128xf32> -> vector<1x128xf32>
    %c0_21 = arith.constant 0 : index
    %c0_22 = arith.constant 0 : index
    %137 = vector.load %arg4[%c0_21, %c0_22] : memref<162x256xf32, #tpu.memory_space<vmem>>, vector<128x256xf32>
    %cst_23 = arith.constant dense<0.000000e+00> : vector<1x256xf32>
    %138 = tpu.matmul %136, %137, %cst_23 {dimension_numbers = #tpu.dot_dimension_numbers<[1], [0], [0], [1], [0, 0, 1, 1], [], []>} : vector<1x128xf32>, vector<128x256xf32>, vector<1x256xf32> -> vector<1x256xf32>
    %c0_24 = arith.constant 0 : index
    %c0_25 = arith.constant 0 : index
    %139 = vector.load %arg1[%c0_24, %c0_25] : memref<1x34xf32, #tpu.memory_space<vmem>>, vector<1x34xf32>
    %c128 = arith.constant 128 : index
    %c0_26 = arith.constant 0 : index
    %140 = vector.load %arg4[%c128, %c0_26] : memref<162x256xf32, #tpu.memory_space<vmem>>, vector<34x256xf32>
    %cst_27 = arith.constant dense<0.000000e+00> : vector<1x256xf32>
    %141 = tpu.matmul %139, %140, %cst_27 {dimension_numbers = #tpu.dot_dimension_numbers<[1], [0], [0], [1], [0, 0, 1, 1], [], []>} : vector<1x34xf32>, vector<34x256xf32>, vector<1x256xf32> -> vector<1x256xf32>
    %142 = arith.addf %138, %141 : vector<1x256xf32>
    %c0_28 = arith.constant 0 : index
    %c0_29 = arith.constant 0 : index
    %143 = vector.load %arg5[%c0_28, %c0_29] : memref<1x256xf32, #tpu.memory_space<vmem>>, vector<1x256xf32>
    tpu.vector_store %arg5[%c0_28, %c0_29], %142 {strides = array<i32>} : memref<1x256xf32, #tpu.memory_space<vmem>>, vector<1x256xf32>,
    %c0_30 = arith.constant 0 : index
    %c0_31 = arith.constant 0 : index
    %144 = vector.load %arg6[%c0_30, %c0_31] : memref<16x128xf32, #tpu.memory_space<vmem>>, vector<8x128xf32>
    tpu.vector_store %arg6[%c0_30, %c0_31], %123 {strides = array<i32>} : memref<16x128xf32, #tpu.memory_space<vmem>>, vector<8x128xf32>,
    %c8_32 = arith.constant 8 : index
    %c0_33 = arith.constant 0 : index
    %145 = vector.load %arg6[%c8_32, %c0_33] : memref<16x128xf32, #tpu.memory_space<vmem>>, vector<8x128xf32>
    tpu.vector_store %arg6[%c8_32, %c0_33], %127 {strides = array<i32>} : memref<16x128xf32, #tpu.memory_space<vmem>>, vector<8x128xf32>,
    return
  }
}

</mosaic_0001>

<llo_original>
// kernel: ntm_s4d_forward.1
$region0: #{ntm_s4d_forward.1}
  #allocation0 [shape = 'u32[]', space=smem, size = 0x4, offset = 0x4, fixed_abs, tag = 'smem constant byte address 0x4 - core index']
  #allocation1 [shape = 'u32[144,128]{1,0:T(1,128)}', space=vmem, size = 0x12000, scoped, tag = 'internal scratch']
  %s0 = inlined_call_operand.vmem [shape: f32[64,24], index: 0, kind: input, shape index: {}]
  %s1 = inlined_call_operand.vmem [shape: f32[1,34], index: 1, kind: input, shape index: {}]
  %s2 = inlined_call_operand.vmem [shape: f32[16,128], index: 2, kind: input, shape index: {}, may-alias: {2,6}]
  %s3 = inlined_call_operand.hbm [shape: f32[120,128], index: 3, kind: input, shape index: {}]
  %s4 = inlined_call_operand.vmem [shape: f32[162,256], index: 4, kind: input, shape index: {}]
  %s5 = inlined_call_operand.hbm [shape: f32[1,256], index: 5, kind: output, shape index: {0}]
  %s6 = inlined_call_operand.vmem [shape: f32[16,128], index: 6, kind: output, shape index: {1}, may-alias: {2,6}]
  %7 = xla_tuple %s5, %s6
  %s8 = sld [smem:[#allocation0]]
  $region42: #{ntm_s4d_forward.1} parent=0
    _
  %s10 = ssub.s32 1, %s8
  %s11 = scalar_select 0, %s10, %s8
  $region1: #{ntm_s4d_forward.1} parent=0
    #allocation2 [shape = 'u8[61440]{0}', space=vmem, size = 0xf000, scoped, tag = 'input window, operand 3, single buffered']
    #allocation3 [shape = 's32[1]{0}', space=sflag, size = 0x4, scoped, tag = 'scoped memory for ntm_s4d_forward.1']
    #allocation4 [shape = 's32[1]{0}', space=sflag, size = 0x4, scoped, tag = 'scoped memory for ntm_s4d_forward.1']
    #allocation5 [shape = 'u8[1024]{0}', space=vmem, size = 0x400, scoped, tag = 'output window, operand 0, single buffered']
    %12 = vsyncpa [#allocation3], 0
    %13 = vsyncpa [#allocation4], 0
    // Predicated region
    $region2: #{ntm_s4d_forward.1} parent=1 // pred_check
      _
    $region3: #{ntm_s4d_forward.1} parent=1 // pred_check_branch
      %15 = sbr.rel (0) target = $region5
    $region4: #{ntm_s4d_forward.1} parent=1 // pred_region
      _
    $region5: #{ntm_s4d_forward.1} parent=1 // pred_fallthru
      _
    // Predicated region
    $region6: #{ntm_s4d_forward.1} parent=1 // pred_check
      _
    $region7: #{ntm_s4d_forward.1} parent=1 // pred_check_branch
      %17 = sbr.rel (0) target = $region9
    $region8: #{ntm_s4d_forward.1} parent=1 // pred_region
      _
    $region9: #{ntm_s4d_forward.1} parent=1 // pred_fallthru
      _
    // Predicated region
    $region10: #{ntm_s4d_forward.1} parent=1 // pred_check
      _
    $region11: #{ntm_s4d_forward.1} parent=1 // pred_check_branch
      %19 = sbr.rel (0) target = $region13
    $region12: #{ntm_s4d_forward.1} parent=1 // pred_region
      _
    $region13: #{ntm_s4d_forward.1} parent=1 // pred_fallthru
      _
    // Predicated region
    $region14: #{ntm_s4d_forward.1} parent=1 // pred_check
      _
    $region15: #{ntm_s4d_forward.1} parent=1 // pred_check_branch
      %21 = sbr.rel (0) target = $region17
    $region16: #{ntm_s4d_forward.1} parent=1 // pred_region
      %s23 = ssub.s32 1920, 1920
      %24 = vsyncadd [#allocation3], %s23
      %s25 = sshll.u32 [#allocation2], 4
      %s26 = int_to_ptr.vmem [resolvable:$true] %s25
      %31 = dma.hbm_to_vmem [thread:$0]  %s3, 1920, %s26, [#allocation3], 128, 128, 8
    $region17: #{ntm_s4d_forward.1} parent=1 // pred_fallthru
      _
    // Predicated region
    $region18: #{ntm_s4d_forward.1} parent=1 // pred_check
      _
    $region19: #{ntm_s4d_forward.1} parent=1 // pred_check_branch
      %33 = sbr.rel (0) target = $region21
    $region20: #{ntm_s4d_forward.1} parent=1 // pred_region
      _
    $region21: #{ntm_s4d_forward.1} parent=1 // pred_fallthru
      _
    // Predicated region
    $region22: #{ntm_s4d_forward.1} parent=1 // pred_check
      _
    $region23: #{ntm_s4d_forward.1} parent=1 // pred_check_branch
      %35 = sbr.rel (0) target = $region25
    $region24: #{ntm_s4d_forward.1} parent=1 // pred_region
      %36 = dma.done [#allocation3], 1920
    $region25: #{ntm_s4d_forward.1} parent=1 // pred_fallthru
      _
    %v37 = vld [vmem:[%s0] sm:$0xff]
    %v38 = vld [vmem:[%s0 + $0x8] sm:$0xff]
    %v39 = vld [vmem:[%s0 + $0x10] sm:$0xff]
    %v40 = vld [vmem:[%s0 + $0x18] sm:$0xff]
    %v41 = vld [vmem:[%s0 + $0x20] sm:$0xff]
    %v42 = vld [vmem:[%s0 + $0x28] sm:$0xff]
    %v43 = vld [vmem:[%s0 + $0x30] sm:$0xff]
    %v44 = vld [vmem:[%s0 + $0x38] sm:$0xff]
    %v45 = vld [vmem:[#allocation2] sm:$0xff]
    %v46 = vld [vmem:[#allocation2 + $0x8] sm:$0xff]
    %v47 = vld [vmem:[#allocation2 + $0x10] sm:$0xff]
    %v48 = vld [vmem:[%s1] sm:$0x1]
    %v49 = vld [vmem:[#allocation2 + $0x18] sm:$0xff]
    %v50 = vld [vmem:[#allocation2 + $0x20] sm:$0xff]
    %v51 = vld [vmem:[#allocation2 + $0x28] sm:$0xff]
    %v52 = vld [vmem:[#allocation2 + $0x30] sm:$0xff]
    %v53 = vld [vmem:[#allocation2 + $0x38] sm:$0x3]
    %vm54 = vcmask 277504
    %v56 = vsel %vm54, %v48, 0
    %vm58 = vcmask 1041408
    %v60 = vsel %vm58, %v53, 0
    %62 = vmatprep.subr.mxu0 0.0
    %63 = vmatpush1.msra.mxu0 0.0
    %64 = vmatprep.subr.mxu0 0.0
    %65 = vmatpush1.msra.mxu0 0.0
    %66 = vmatprep.subr.mxu0 0.0
    %67 = vmatpush1.msra.mxu0 0.0
    %68 = vmatprep.subr.mxu0 0.0
    %69 = vmatpush1.msra.mxu0 0.0
    %70 = vmatprep.subr.mxu0 0.0
    %71 = vmatpush1.msra.mxu0 0.0
    %72 = vmatprep.subr.mxu0 0.0
    %73 = vmatpush1.msra.mxu0 0.0
    %74 = vmatprep.subr.mxu0 0.0
    %75 = vmatpush1.msra.mxu0 0.0
    %76 = vmatprep.subr.mxu0 0.0
    %77 = vmatpush1.msra.mxu0 0.0
    %78 = vmatprep.subr.mxu0 0.0
    %79 = vmatpush1.msra.mxu0 0.0
    %80 = vmatprep.subr.mxu0 0.0
    %81 = vmatpush1.msra.mxu0 0.0
    %82 = vmatprep.subr.mxu0 0.0
    %83 = vmatpush1.msra.mxu0 0.0
    %84 = vmatprep.subr.mxu0 0.0
    %85 = vmatpush1.msra.mxu0 %v60
    %86 = vmatprep.subr.mxu0 0.0
    %87 = vmatpush1.msra.mxu0 %v52
    %88 = vmatprep.subr.mxu0 0.0
    %89 = vmatpush1.msra.mxu0 %v51
    %90 = vmatprep.subr.mxu0 0.0
    %91 = vmatpush1.msra.mxu0 %v50
    %92 = vmatprep.subr.mxu0 0.0
    %93 = vmatpush1.msra.mxu0 %v49
    %94 = vmatprep.subr.mxu0 0.0
    %95 = vmatpush2.msra.mxu0 0.0
    %96 = vmatprep.subr.mxu0 0.0
    %97 = vmatpush2.msra.mxu0 0.0
    %98 = vmatprep.subr.mxu0 0.0
    %99 = vmatpush2.msra.mxu0 0.0
    %100 = vmatprep.subr.mxu0 0.0
    %101 = vmatpush2.msra.mxu0 0.0
    %102 = vmatprep.subr.mxu0 0.0
    %103 = vmatpush2.msra.mxu0 0.0
    %104 = vmatprep.subr.mxu0 0.0
    %105 = vmatpush2.msra.mxu0 0.0
    %106 = vmatprep.subr.mxu0 0.0
    %107 = vmatpush2.msra.mxu0 0.0
    %108 = vmatprep.subr.mxu0 0.0
    %109 = vmatpush2.msra.mxu0 0.0
    %110 = vmatprep.subr.mxu0 0.0
    %111 = vmatpush2.msra.mxu0 0.0
    %112 = vmatprep.subr.mxu0 0.0
    %113 = vmatpush2.msra.mxu0 0.0
    %114 = vmatprep.subr.mxu0 0.0
    %115 = vmatpush2.msra.mxu0 0.0
    %116 = vmatprep.subr.mxu0 0.0
    %117 = vmatpush2.msra.mxu0 0.0
    %118 = vmatprep.subr.mxu0 0.0
    %119 = vmatpush2.msra.mxu0 0.0
    %120 = vmatprep.subr.mxu0 0.0
    %121 = vmatpush2.msra.mxu0 0.0
    %122 = vmatprep.subr.mxu0 0.0
    %123 = vmatpush2.msra.mxu0 0.0
    %124 = vmatprep.subr.mxu0 0.0
    %125 = vmatpush2.msra.mxu0 0.0
    %126 = vmatprep.mubr.f32.mxu0 0.0
    %127 = vmatmul.mubr.f32.gmra.mxu0 %v56
    %v128 = vpop.f32.mrf.mxu0
    %v129 = vadd.f32 0.0, %v128
    %v130 = vpop.f32.mrf.mxu0
    %131 = vdwg.mxu0
    %v132 = vlaneseq
    %v133 = vshrl.u32 %v132, 7
    %v134 = vsub.s32 0, %v133
    %v135 = vrot.slane %v129, %v134
    %vm136 = vcmask 195584
    %v138 = vsel %vm136, %v37, 0
    %v141 = vsel %vm136, %v38, 0
    %v144 = vsel %vm136, %v39, 0
    %v147 = vsel %vm136, %v40, 0
    %v150 = vsel %vm136, %v41, 0
    %v153 = vsel %vm136, %v42, 0
    %v156 = vsel %vm136, %v43, 0
    %v159 = vsel %vm136, %v44, 0
    %161 = vmatprep.subr.mxu0 0.0
    %162 = vmatpush1.msra.mxu0 0.0
    %163 = vmatprep.subr.mxu0 0.0
    %164 = vmatpush1.msra.mxu0 0.0
    %165 = vmatprep.subr.mxu0 0.0
    %166 = vmatpush1.msra.mxu0 0.0
    %167 = vmatprep.subr.mxu0 0.0
    %168 = vmatpush1.msra.mxu0 0.0
    %169 = vmatprep.subr.mxu0 0.0
    %170 = vmatpush1.msra.mxu0 0.0
    %171 = vmatprep.subr.mxu0 0.0
    %172 = vmatpush1.msra.mxu0 0.0
    %173 = vmatprep.subr.mxu0 0.0
    %174 = vmatpush1.msra.mxu0 0.0
    %175 = vmatprep.subr.mxu0 0.0
    %176 = vmatpush1.msra.mxu0 0.0
    %177 = vmatprep.subr.mxu0 0.0
    %178 = vmatpush1.msra.mxu0 0.0
    %179 = vmatprep.subr.mxu0 0.0
    %180 = vmatpush1.msra.mxu0 0.0
    %181 = vmatprep.subr.mxu0 0.0
    %182 = vmatpush1.msra.mxu0 0.0
    %183 = vmatprep.subr.mxu0 0.0
    %184 = vmatpush1.msra.mxu0 0.0
    %185 = vmatprep.subr.mxu0 0.0
    %186 = vmatpush1.msra.mxu0 0.0
    %187 = vmatprep.subr.mxu0 0.0
    %188 = vmatpush1.msra.mxu0 %v47
    %189 = vmatprep.subr.mxu0 0.0
    %190 = vmatpush1.msra.mxu0 %v46
    %191 = vmatprep.subr.mxu0 0.0
    %192 = vmatpush1.msra.mxu0 %v45
    %193 = vmatprep.subr.mxu0 0.0
    %194 = vmatpush2.msra.mxu0 0.0
    %195 = vmatprep.subr.mxu0 0.0
    %196 = vmatpush2.msra.mxu0 0.0
    %197 = vmatprep.subr.mxu0 0.0
    %198 = vmatpush2.msra.mxu0 0.0
    %199 = vmatprep.subr.mxu0 0.0
    %200 = vmatpush2.msra.mxu0 0.0
    %201 = vmatprep.subr.mxu0 0.0
    %202 = vmatpush2.msra.mxu0 0.0
    %203 = vmatprep.subr.mxu0 0.0
    %204 = vmatpush2.msra.mxu0 0.0
    %205 = vmatprep.subr.mxu0 0.0
    %206 = vmatpush2.msra.mxu0 0.0
    %207 = vmatprep.subr.mxu0 0.0
    %208 = vmatpush2.msra.mxu0 0.0
    %209 = vmatprep.subr.mxu0 0.0
    %210 = vmatpush2.msra.mxu0 0.0
    %211 = vmatprep.subr.mxu0 0.0
    %212 = vmatpush2.msra.mxu0 0.0
    %213 = vmatprep.subr.mxu0 0.0
    %214 = vmatpush2.msra.mxu0 0.0
    %215 = vmatprep.subr.mxu0 0.0
    %216 = vmatpush2.msra.mxu0 0.0
    %217 = vmatprep.subr.mxu0 0.0
    %218 = vmatpush2.msra.mxu0 0.0
    %219 = vmatprep.subr.mxu0 0.0
    %220 = vmatpush2.msra.mxu0 0.0
    %221 = vmatprep.subr.mxu0 0.0
    %222 = vmatpush2.msra.mxu0 0.0
    %223 = vmatprep.subr.mxu0 0.0
    %224 = vmatpush2.msra.mxu0 0.0
    %225 = vmatprep.mubr.f32.mxu0 0.0
    %226 = vmatmul.mubr.f32.gmra.mxu0 %v138
    %v227 = vpop.f32.mrf.mxu0
    %v228 = vadd.f32 %v135, %v227
    %v229 = vpop.f32.mrf.mxu0
    %230 = vmatprep.mubr.f32.mxu0 0.0
    %231 = vmatmul.mubr.f32.gmra.mxu0 %v141
    %v232 = vpop.f32.mrf.mxu0
    %v233 = vadd.f32 %v135, %v232
    %v234 = vpop.f32.mrf.mxu0
    %235 = vmatprep.mubr.f32.mxu0 0.0
    %236 = vmatmul.mubr.f32.gmra.mxu0 %v144
    %v237 = vpop.f32.mrf.mxu0
    %v238 = vadd.f32 %v135, %v237
    %v239 = vpop.f32.mrf.mxu0
    %240 = vmatprep.mubr.f32.mxu0 0.0
    %241 = vmatmul.mubr.f32.gmra.mxu0 %v147
    %v242 = vpop.f32.mrf.mxu0
    %v243 = vadd.f32 %v135, %v242
    %v244 = vpop.f32.mrf.mxu0
    %245 = vmatprep.mubr.f32.mxu0 0.0
    %246 = vmatmul.mubr.f32.gmra.mxu0 %v150
    %v247 = vpop.f32.mrf.mxu0
    %v248 = vadd.f32 %v135, %v247
    %v249 = vpop.f32.mrf.mxu0
    %250 = vmatprep.mubr.f32.mxu0 0.0
    %251 = vmatmul.mubr.f32.gmra.mxu0 %v153
    %v252 = vpop.f32.mrf.mxu0
    %v253 = vadd.f32 %v135, %v252
    %v254 = vpop.f32.mrf.mxu0
    %255 = vmatprep.mubr.f32.mxu0 0.0
    %256 = vmatmul.mubr.f32.gmra.mxu0 %v156
    %v257 = vpop.f32.mrf.mxu0
    %v258 = vadd.f32 %v135, %v257
    %v259 = vpop.f32.mrf.mxu0
    %260 = vmatprep.mubr.f32.mxu0 0.0
    %261 = vmatmul.mubr.f32.gmra.mxu0 %v159
    %v262 = vpop.f32.mrf.mxu0
    %v263 = vadd.f32 %v135, %v262
    %v264 = vpop.f32.mrf.mxu0
    %265 = vdwg.mxu0
    %v266 = vld [vmem:[#allocation2 + $0x40] sm:$0xff]
    %v267 = vld [vmem:[#allocation2 + $0x48] sm:$0xff]
    %v268 = vld [vmem:[#allocation2 + $0x50] sm:$0xff]
    %v269 = vld [vmem:[#allocation2 + $0x58] sm:$0xff]
    %v270 = vld [vmem:[#allocation2 + $0x60] sm:$0xff]
    %v271 = vld [vmem:[#allocation2 + $0x68] sm:$0xff]
    %v272 = vld [vmem:[#allocation2 + $0x70] sm:$0xff]
    %v273 = vadd.f32 %v228, %v233
    %v274 = vadd.f32 %v273, %v238
    %v275 = vadd.f32 %v274, %v243
    %v276 = vadd.f32 %v275, %v248
    %v277 = vadd.f32 %v276, %v253
    %v278 = vadd.f32 %v277, %v258
    %v279 = vadd.f32 %v278, %v263
    %v280 = vmul.f32 %v228, %v268
    %v281 = vmul.f32 %v233, %v268
    %v282 = vmul.f32 %v238, %v268
    %v283 = vmul.f32 %v243, %v268
    %v284 = vmul.f32 %v248, %v268
    %v285 = vmul.f32 %v253, %v268
    %v286 = vmul.f32 %v258, %v268
    %v287 = vmul.f32 %v263, %v268
    %v288 = vmul.f32 %v228, %v269
    %v289 = vmul.f32 %v233, %v269
    %v290 = vmul.f32 %v238, %v269
    %v291 = vmul.f32 %v243, %v269
    %v292 = vmul.f32 %v248, %v269
    %v293 = vmul.f32 %v253, %v269
    %v294 = vmul.f32 %v258, %v269
    %v295 = vmul.f32 %v263, %v269
    %v296 = vld [vmem:[%s2] sm:$0xff]
    %v297 = vld [vmem:[%s2 + $0x8] sm:$0xff]
    %v298 = vmul.f32 %v266, %v296
    %v299 = vmul.f32 %v267, %v297
    %v300 = vsub.f32 %v298, %v299
    %v301 = vadd.f32 %v300, %v280
    %v302 = vmul.f32 %v266, %v297
    %v303 = vmul.f32 %v267, %v296
    %v304 = vadd.f32 %v302, %v303
    %v305 = vadd.f32 %v304, %v288
    %v306 = vadd.f32 %v301, 0.0
    %v307 = vadd.f32 %v305, 0.0
    %v308 = vmul.f32 %v266, %v301
    %v309 = vmul.f32 %v267, %v305
    %v310 = vsub.f32 %v308, %v309
    %v311 = vadd.f32 %v310, %v281
    %v312 = vmul.f32 %v266, %v305
    %v313 = vmul.f32 %v267, %v301
    %v314 = vadd.f32 %v312, %v313
    %v315 = vadd.f32 %v314, %v289
    %v316 = vadd.f32 %v306, %v311
    %v317 = vadd.f32 %v307, %v315
    %v318 = vmul.f32 %v266, %v311
    %v319 = vmul.f32 %v267, %v315
    %v320 = vsub.f32 %v318, %v319
    %v321 = vadd.f32 %v320, %v282
    %v322 = vmul.f32 %v266, %v315
    %v323 = vmul.f32 %v267, %v311
    %v324 = vadd.f32 %v322, %v323
    %v325 = vadd.f32 %v324, %v290
    %v326 = vadd.f32 %v316, %v321
    %v327 = vadd.f32 %v317, %v325
    %v328 = vmul.f32 %v266, %v321
    %v329 = vmul.f32 %v267, %v325
    %v330 = vsub.f32 %v328, %v329
    %v331 = vadd.f32 %v330, %v283
    %v332 = vmul.f32 %v266, %v325
    %v333 = vmul.f32 %v267, %v321
    %v334 = vadd.f32 %v332, %v333
    %v335 = vadd.f32 %v334, %v291
    %v336 = vadd.f32 %v326, %v331
    %v337 = vadd.f32 %v327, %v335
    %v338 = vmul.f32 %v266, %v331
    %v339 = vmul.f32 %v267, %v335
    %v340 = vsub.f32 %v338, %v339
    %v341 = vadd.f32 %v340, %v284
    %v342 = vmul.f32 %v266, %v335
    %v343 = vmul.f32 %v267, %v331
    %v344 = vadd.f32 %v342, %v343
    %v345 = vadd.f32 %v344, %v292
    %v346 = vadd.f32 %v336, %v341
    %v347 = vadd.f32 %v337, %v345
    %v348 = vmul.f32 %v266, %v341
    %v349 = vmul.f32 %v267, %v345
    %v350 = vsub.f32 %v348, %v349
    %v351 = vadd.f32 %v350, %v285
    %v352 = vmul.f32 %v266, %v345
    %v353 = vmul.f32 %v267, %v341
    %v354 = vadd.f32 %v352, %v353
    %v355 = vadd.f32 %v354, %v293
    %v356 = vadd.f32 %v346, %v351
    %v357 = vadd.f32 %v347, %v355
    %v358 = vmul.f32 %v266, %v351
    %v359 = vmul.f32 %v267, %v355
    %v360 = vsub.f32 %v358, %v359
    %v361 = vadd.f32 %v360, %v286
    %v362 = vmul.f32 %v266, %v355
    %v363 = vmul.f32 %v267, %v351
    %v364 = vadd.f32 %v362, %v363
    %v365 = vadd.f32 %v364, %v294
    %v366 = vadd.f32 %v356, %v361
    %v367 = vadd.f32 %v357, %v365
    %v368 = vmul.f32 %v266, %v361
    %v369 = vmul.f32 %v267, %v365
    %v370 = vsub.f32 %v368, %v369
    %v371 = vadd.f32 %v370, %v287
    %v372 = vmul.f32 %v266, %v365
    %v373 = vmul.f32 %v267, %v361
    %v374 = vadd.f32 %v372, %v373
    %v375 = vadd.f32 %v374, %v295
    %v376 = vadd.f32 %v366, %v371
    %v377 = vadd.f32 %v367, %v375
    %v378 = vmul.f32 %v270, %v376
    %v379 = vmul.f32 %v271, %v377
    %v380 = vsub.f32 %v378, %v379
    %v381 = vmul.f32 %v272, %v279
    %v382 = vadd.f32 %v380, %v381
    %vm383 = vcmask 64512
    %v385 = vsel %vm383, 1.0, 0
    %387 = vmatprep.subr.mxu0 0.0
    %388 = vmatpush1.msra.mxu0 0.0
    %389 = vmatprep.subr.mxu0 0.0
    %390 = vmatpush1.msra.mxu0 0.0
    %391 = vmatprep.subr.mxu0 0.0
    %392 = vmatpush1.msra.mxu0 0.0
    %393 = vmatprep.subr.mxu0 0.0
    %394 = vmatpush1.msra.mxu0 0.0
    %395 = vmatprep.subr.mxu0 0.0
    %396 = vmatpush1.msra.mxu0 0.0
    %397 = vmatprep.subr.mxu0 0.0
    %398 = vmatpush1.msra.mxu0 0.0
    %399 = vmatprep.subr.mxu0 0.0
    %400 = vmatpush1.msra.mxu0 0.0
    %401 = vmatprep.subr.mxu0 0.0
    %402 = vmatpush1.msra.mxu0 0.0
    %403 = vmatprep.subr.mxu0 0.0
    %404 = vmatpush1.msra.mxu0 0.0
    %405 = vmatprep.subr.mxu0 0.0
    %406 = vmatpush1.msra.mxu0 0.0
    %407 = vmatprep.subr.mxu0 0.0
    %408 = vmatpush1.msra.mxu0 0.0
    %409 = vmatprep.subr.mxu0 0.0
    %410 = vmatpush1.msra.mxu0 0.0
    %411 = vmatprep.subr.mxu0 0.0
    %412 = vmatpush1.msra.mxu0 0.0
    %413 = vmatprep.subr.mxu0 0.0
    %414 = vmatpush1.msra.mxu0 0.0
    %415 = vmatprep.subr.mxu0 0.0
    %416 = vmatpush1.msra.mxu0 0.0
    %417 = vmatprep.subr.mxu0 0.0
    %418 = vmatpush1.msra.mxu0 %v382
    %419 = vmatprep.subr.mxu0 0.0
    %420 = vmatpush2.msra.mxu0 0.0
    %421 = vmatprep.subr.mxu0 0.0
    %422 = vmatpush2.msra.mxu0 0.0
    %423 = vmatprep.subr.mxu0 0.0
    %424 = vmatpush2.msra.mxu0 0.0
    %425 = vmatprep.subr.mxu0 0.0
    %426 = vmatpush2.msra.mxu0 0.0
    %427 = vmatprep.subr.mxu0 0.0
    %428 = vmatpush2.msra.mxu0 0.0
    %429 = vmatprep.subr.mxu0 0.0
    %430 = vmatpush2.msra.mxu0 0.0
    %431 = vmatprep.subr.mxu0 0.0
    %432 = vmatpush2.msra.mxu0 0.0
    %433 = vmatprep.subr.mxu0 0.0
    %434 = vmatpush2.msra.mxu0 0.0
    %435 = vmatprep.subr.mxu0 0.0
    %436 = vmatpush2.msra.mxu0 0.0
    %437 = vmatprep.subr.mxu0 0.0
    %438 = vmatpush2.msra.mxu0 0.0
    %439 = vmatprep.subr.mxu0 0.0
    %440 = vmatpush2.msra.mxu0 0.0
    %441 = vmatprep.subr.mxu0 0.0
    %442 = vmatpush2.msra.mxu0 0.0
    %443 = vmatprep.subr.mxu0 0.0
    %444 = vmatpush2.msra.mxu0 0.0
    %445 = vmatprep.subr.mxu0 0.0
    %446 = vmatpush2.msra.mxu0 0.0
    %447 = vmatprep.subr.mxu0 0.0
    %448 = vmatpush2.msra.mxu0 0.0
    %449 = vmatprep.subr.mxu0 0.0
    %450 = vmatpush2.msra.mxu0 0.0
    %451 = vmatprep.mubr.f32.mxu0 0.0
    %452 = vmatmul.mubr.f32.gmra.mxu0 %v385
    %v453 = vpop.f32.mrf.mxu0
    %v454 = vadd.f32 0.0, %v453
    %v455 = vpop.f32.mrf.mxu0
    %456 = vdwg.mxu0
    %v457 = vld [vmem:[%s4] sm:$0xff]
    %v458 = vld [vmem:[%s4 + $0x8] sm:$0xff]
    %v459 = vld [vmem:[%s4 + $0x10] sm:$0xff]
    %v460 = vld [vmem:[%s4 + $0x18] sm:$0xff]
    %v461 = vld [vmem:[%s4 + $0x20] sm:$0xff]
    %v462 = vld [vmem:[%s4 + $0x28] sm:$0xff]
    %v463 = vld [vmem:[%s4 + $0x30] sm:$0xff]
    %v464 = vld [vmem:[%s4 + $0x38] sm:$0xff]
    %v465 = vld [vmem:[%s4 + $0x40] sm:$0xff]
    %v466 = vld [vmem:[%s4 + $0x48] sm:$0xff]
    %v467 = vld [vmem:[%s4 + $0x50] sm:$0xff]
    %v468 = vld [vmem:[%s4 + $0x58] sm:$0xff]
    %v469 = vld [vmem:[%s4 + $0x60] sm:$0xff]
    %v470 = vld [vmem:[%s4 + $0x68] sm:$0xff]
    %v471 = vld [vmem:[%s4 + $0x70] sm:$0xff]
    %v472 = vld [vmem:[%s4 + $0x78] sm:$0xff]
    %v473 = vld [vmem:[%s4 + $0x80] sm:$0xff]
    %v474 = vld [vmem:[%s4 + $0x88] sm:$0xff]
    %v475 = vld [vmem:[%s4 + $0x90] sm:$0xff]
    %v476 = vld [vmem:[%s4 + $0x98] sm:$0xff]
    %v477 = vld [vmem:[%s4 + $0xa0] sm:$0xff]
    %v478 = vld [vmem:[%s4 + $0xa8] sm:$0xff]
    %v479 = vld [vmem:[%s4 + $0xb0] sm:$0xff]
    %v480 = vld [vmem:[%s4 + $0xb8] sm:$0xff]
    %v481 = vld [vmem:[%s4 + $0xc0] sm:$0xff]
    %v482 = vld [vmem:[%s4 + $0xc8] sm:$0xff]
    %v483 = vld [vmem:[%s4 + $0xd0] sm:$0xff]
    %v484 = vld [vmem:[%s4 + $0xd8] sm:$0xff]
    %v485 = vld [vmem:[%s4 + $0xe0] sm:$0xff]
    %v486 = vld [vmem:[%s4 + $0xe8] sm:$0xff]
    %v487 = vld [vmem:[%s4 + $0xf0] sm:$0xff]
    %v488 = vld [vmem:[%s4 + $0xf8] sm:$0xff]
    %v489 = vld [vmem:[%s4 + $0x100] sm:$0xff]
    %v490 = vld [vmem:[%s4 + $0x108] sm:$0xff]
    %v491 = vld [vmem:[%s4 + $0x110] sm:$0xff]
    %v492 = vld [vmem:[%s4 + $0x118] sm:$0xff]
    %v493 = vld [vmem:[%s4 + $0x120] sm:$0xff]
    %v494 = vld [vmem:[%s4 + $0x128] sm:$0xff]
    %v495 = vld [vmem:[%s4 + $0x130] sm:$0xff]
    %v496 = vld [vmem:[%s4 + $0x138] sm:$0xff]
    %v497 = vld [vmem:[%s4 + $0x140] sm:$0x3]
    %v498 = vld [vmem:[%s4 + $0x148] sm:$0x3]
    %v500 = vsel %vm58, %v497, 0
    %v503 = vsel %vm58, %v498, 0
    %505 = vmatprep.subr.mxu0 0.0
    %506 = vmatpush1.msra.mxu0 0.0
    %507 = vmatprep.subr.mxu0 0.0
    %508 = vmatpush1.msra.mxu0 0.0
    %509 = vmatprep.subr.mxu0 0.0
    %510 = vmatpush1.msra.mxu0 0.0
    %511 = vmatprep.subr.mxu0 0.0
    %512 = vmatpush1.msra.mxu0 0.0
    %513 = vmatprep.subr.mxu0 0.0
    %514 = vmatpush1.msra.mxu0 0.0
    %515 = vmatprep.subr.mxu0 0.0
    %516 = vmatpush1.msra.mxu0 0.0
    %517 = vmatprep.subr.mxu0 0.0
    %518 = vmatpush1.msra.mxu0 0.0
    %519 = vmatprep.subr.mxu0 0.0
    %520 = vmatpush1.msra.mxu0 0.0
    %521 = vmatprep.subr.mxu0 0.0
    %522 = vmatpush1.msra.mxu0 0.0
    %523 = vmatprep.subr.mxu0 0.0
    %524 = vmatpush1.msra.mxu0 0.0
    %525 = vmatprep.subr.mxu0 0.0
    %526 = vmatpush1.msra.mxu0 0.0
    %527 = vmatprep.subr.mxu0 %v503
    %528 = vmatpush1.msra.mxu0 %v500
    %529 = vmatprep.subr.mxu0 %v496
    %530 = vmatpush1.msra.mxu0 %v495
    %531 = vmatprep.subr.mxu0 %v494
    %532 = vmatpush1.msra.mxu0 %v493
    %533 = vmatprep.subr.mxu0 %v492
    %534 = vmatpush1.msra.mxu0 %v491
    %535 = vmatprep.subr.mxu0 %v490
    %536 = vmatpush1.msra.mxu0 %v489
    %537 = vmatprep.subr.mxu0 0.0
    %538 = vmatpush2.msra.mxu0 0.0
    %539 = vmatprep.subr.mxu0 0.0
    %540 = vmatpush2.msra.mxu0 0.0
    %541 = vmatprep.subr.mxu0 0.0
    %542 = vmatpush2.msra.mxu0 0.0
    %543 = vmatprep.subr.mxu0 0.0
    %544 = vmatpush2.msra.mxu0 0.0
    %545 = vmatprep.subr.mxu0 0.0
    %546 = vmatpush2.msra.mxu0 0.0
    %547 = vmatprep.subr.mxu0 0.0
    %548 = vmatpush2.msra.mxu0 0.0
    %549 = vmatprep.subr.mxu0 0.0
    %550 = vmatpush2.msra.mxu0 0.0
    %551 = vmatprep.subr.mxu0 0.0
    %552 = vmatpush2.msra.mxu0 0.0
    %553 = vmatprep.subr.mxu0 0.0
    %554 = vmatpush2.msra.mxu0 0.0
    %555 = vmatprep.subr.mxu0 0.0
    %556 = vmatpush2.msra.mxu0 0.0
    %557 = vmatprep.subr.mxu0 0.0
    %558 = vmatpush2.msra.mxu0 0.0
    %559 = vmatprep.subr.mxu0 0.0
    %560 = vmatpush2.msra.mxu0 0.0
    %561 = vmatprep.subr.mxu0 0.0
    %562 = vmatpush2.msra.mxu0 0.0
    %563 = vmatprep.subr.mxu0 0.0
    %564 = vmatpush2.msra.mxu0 0.0
    %565 = vmatprep.subr.mxu0 0.0
    %566 = vmatpush2.msra.mxu0 0.0
    %567 = vmatprep.subr.mxu0 0.0
    %568 = vmatpush2.msra.mxu0 0.0
    %569 = vmatprep.mubr.f32.mxu0 0.0
    %570 = vmatmul.mubr.f32.gmra.mxu0 %v56
    %v571 = vpop.f32.mrf.mxu0
    %v572 = vadd.f32 0.0, %v571
    %v573 = vpop.f32.mrf.mxu0
    %v574 = vadd.f32 0.0, %v573
    %575 = vdwg.mxu0
    %576 = vmatprep.subr.mxu0 %v488
    %577 = vmatpush1.msra.mxu0 %v487
    %578 = vmatprep.subr.mxu0 %v486
    %579 = vmatpush1.msra.mxu0 %v485
    %580 = vmatprep.subr.mxu0 %v484
    %581 = vmatpush1.msra.mxu0 %v483
    %582 = vmatprep.subr.mxu0 %v482
    %583 = vmatpush1.msra.mxu0 %v481
    %584 = vmatprep.subr.mxu0 %v480
    %585 = vmatpush1.msra.mxu0 %v479
    %586 = vmatprep.subr.mxu0 %v478
    %587 = vmatpush1.msra.mxu0 %v477
    %588 = vmatprep.subr.mxu0 %v476
    %589 = vmatpush1.msra.mxu0 %v475
    %590 = vmatprep.subr.mxu0 %v474
    %591 = vmatpush1.msra.mxu0 %v473
    %592 = vmatprep.subr.mxu0 %v472
    %593 = vmatpush1.msra.mxu0 %v471
    %594 = vmatprep.subr.mxu0 %v470
    %595 = vmatpush1.msra.mxu0 %v469
    %596 = vmatprep.subr.mxu0 %v468
    %597 = vmatpush1.msra.mxu0 %v467
    %598 = vmatprep.subr.mxu0 %v466
    %599 = vmatpush1.msra.mxu0 %v465
    %600 = vmatprep.subr.mxu0 %v464
    %601 = vmatpush1.msra.mxu0 %v463
    %602 = vmatprep.subr.mxu0 %v462
    %603 = vmatpush1.msra.mxu0 %v461
    %604 = vmatprep.subr.mxu0 %v460
    %605 = vmatpush1.msra.mxu0 %v459
    %606 = vmatprep.subr.mxu0 %v458
    %607 = vmatpush1.msra.mxu0 %v457
    %608 = vmatprep.subr.mxu0 0.0
    %609 = vmatpush2.msra.mxu0 0.0
    %610 = vmatprep.subr.mxu0 0.0
    %611 = vmatpush2.msra.mxu0 0.0
    %612 = vmatprep.subr.mxu0 0.0
    %613 = vmatpush2.msra.mxu0 0.0
    %614 = vmatprep.subr.mxu0 0.0
    %615 = vmatpush2.msra.mxu0 0.0
    %616 = vmatprep.subr.mxu0 0.0
    %617 = vmatpush2.msra.mxu0 0.0
    %618 = vmatprep.subr.mxu0 0.0
    %619 = vmatpush2.msra.mxu0 0.0
    %620 = vmatprep.subr.mxu0 0.0
    %621 = vmatpush2.msra.mxu0 0.0
    %622 = vmatprep.subr.mxu0 0.0
    %623 = vmatpush2.msra.mxu0 0.0
    %624 = vmatprep.subr.mxu0 0.0
    %625 = vmatpush2.msra.mxu0 0.0
    %626 = vmatprep.subr.mxu0 0.0
    %627 = vmatpush2.msra.mxu0 0.0
    %628 = vmatprep.subr.mxu0 0.0
    %629 = vmatpush2.msra.mxu0 0.0
    %630 = vmatprep.subr.mxu0 0.0
    %631 = vmatpush2.msra.mxu0 0.0
    %632 = vmatprep.subr.mxu0 0.0
    %633 = vmatpush2.msra.mxu0 0.0
    %634 = vmatprep.subr.mxu0 0.0
    %635 = vmatpush2.msra.mxu0 0.0
    %636 = vmatprep.subr.mxu0 0.0
    %637 = vmatpush2.msra.mxu0 0.0
    %638 = vmatprep.subr.mxu0 0.0
    %639 = vmatpush2.msra.mxu0 0.0
    %640 = vmatprep.mubr.f32.mxu0 0.0
    %641 = vmatmul.mubr.f32.gmra.mxu0 %v454
    %v642 = vpop.f32.mrf.mxu0
    %v643 = vadd.f32 %v572, %v642
    %v644 = vpop.f32.mrf.mxu0
    %v645 = vadd.f32 %v574, %v644
    %646 = vdwg.mxu0
    %v649 = vcombine.low %v643, %v645
    %v651 = vunpack.c.l.s4 1966171168
    %v652 = vunpack.c.0.s8 %v651
    %v653 = vlaneseq
    %v654 = vshrl.u32 %v653, 7
    %v655 = vsub.s32 %v652, %v654
    %v656 = vrot.slane %v649, %v655
    %v658 = vunpack.c.l.s4 1966171168
    %v659 = vunpack.c.0.s8 %v658
    %v660 = vlaneseq
    %v661 = vshrl.u32 %v660, 7
    %v662 = vsub.s32 %v659, %v661
    %v663 = vrot.slane %v656, %v662
    %v665 = vlaneseq
    %vm666 = vcmp.ge.s32.totalorder %v665, 0
    %vm667 = vcmp.lt.s32.totalorder %v665, 256
    %vm668 = vmand %vm666, %vm667
    %669 = vst.msk [vmem:[#allocation5] sm:$0x3] %vm668, %v663
    %670 = vst [vmem:[%s6] sm:$0xff] %v371
    %671 = vst [vmem:[%s6 + $0x8] sm:$0xff] %v375
    // Predicated region
    $region26: #{ntm_s4d_forward.1} parent=1 // pred_check
      _
    $region27: #{ntm_s4d_forward.1} parent=1 // pred_check_branch
      %673 = sbr.rel (0) target = $region29
    $region28: #{ntm_s4d_forward.1} parent=1 // pred_region
      %s675 = ssub.s32 32, 32
      %676 = vsyncadd [#allocation4], %s675
      %s678 = sshll.u32 [#allocation5], 4
      %s679 = int_to_ptr.vmem [resolvable:$true] %s678
      %681 = dma.vmem_to_hbm [thread:$0]  %s679, 32, %s5, [#allocation4]
    $region29: #{ntm_s4d_forward.1} parent=1 // pred_fallthru
      _
    // Predicated region
    $region30: #{ntm_s4d_forward.1} parent=1 // pred_check
      _
    $region31: #{ntm_s4d_forward.1} parent=1 // pred_check_branch
      %683 = sbr.rel (0) target = $region33
    $region32: #{ntm_s4d_forward.1} parent=1 // pred_region
      _
    $region33: #{ntm_s4d_forward.1} parent=1 // pred_fallthru
      _
    // Predicated region
    $region34: #{ntm_s4d_forward.1} parent=1 // pred_check
      _
    $region35: #{ntm_s4d_forward.1} parent=1 // pred_check_branch
      %685 = sbr.rel (0) target = $region37
    $region36: #{ntm_s4d_forward.1} parent=1 // pred_region
      %686 = dma.done [#allocation4], 32
    $region37: #{ntm_s4d_forward.1} parent=1 // pred_fallthru
      _
    // Predicated region
    $region38: #{ntm_s4d_forward.1} parent=1 // pred_check
      _
    $region39: #{ntm_s4d_forward.1} parent=1 // pred_check_branch
      %688 = sbr.rel (0) target = $region41
    $region40: #{ntm_s4d_forward.1} parent=1 // pred_region
      _
    $region41: #{ntm_s4d_forward.1} parent=1 // pred_fallthru
      _
    %689 = vsyncpa [#allocation3], 1
    %690 = vsyncpa [#allocation4], 1

</llo_original>
